<compile_context>
chip_gen: v6e
topology: v6e:2x2x1
jax: 0.10.0
libtpu: 0.0.40
codegen_flags: <defaults>
</compile_context>

<pallas_src>
import jax
import jax.numpy as jnp
from jax.experimental import pallas as pl
from jax.experimental.pallas import tpu as pltpu


def _vnet_kernel(xt_ref, w1_ref, b1_ref, w2t_ref, b2_ref, out_ref):
    # xt:  (Din, TB)  input block, batch on lanes
    # w1:  (H, Din)   PyTorch Linear layout (out_features, in_features)
    # b1:  (H, 1)     column vector -> broadcasts across lanes
    # w2t: (H, O)     PyTorch weight pre-transposed in the wrapper
    # b2:  (O, 1)
    # out: (O, TB)    lane-dense output block
    din = w1_ref.shape[1]
    n_out = w2t_ref.shape[1]

    x_t = xt_ref[...]  # (Din, TB), f32

    # ---- layer 1: VPU broadcast-MAC over the Din input features (no MXU) ----
    # (H, 1) * (1, TB) broadcasts to (H, TB); Din is tiny & static so unroll.
    h = b1_ref[...] + w1_ref[:, 0:1] * x_t[0:1, :]
    for d in range(1, din):
        h = h + w1_ref[:, d:d + 1] * x_t[d:d + 1, :]
    h = jnp.maximum(h, 0.0)  # ReLU in f32

    # ---- layer 2 + sigmoid: per-output sublane reduction, EUP exp + vrcp ----
    for o in range(n_out):
        z = jnp.sum(h * w2t_ref[:, o:o + 1], axis=0, keepdims=True)  # (1, TB)
        z = z + b2_ref[o:o + 1, 0:1]                                  # (1, 1) bcast
        sig = pl.reciprocal(1.0 + jnp.exp(-z), approx=True)
        out_ref[o:o + 1, :] = sig.astype(out_ref.dtype)


def vnet_forward(x, w1, b1, w2, b2, *, block_b=None):
    """Forward pass of VNet. x: (B, Din); w1: (H, Din); b1: (H,);
    w2: (O, H); b2: (O,). Returns (B, O) float32 (same math as the PyTorch
    module: sigmoid(relu(x @ w1.T + b1) @ w2.T + b2))."""
    B, Din = x.shape
    H, _ = w1.shape
    O, _ = w2.shape

    # Batch tile: multiple of 128 lanes; large enough to amortize the ~0.35 us
    # per-step overhead, small enough that double-buffered (Din+O, TB) f32
    # tiles stay far below even v7x's 64 MiB VMEM.
    if block_b is None:
        block_b = min(2048, max(128, int(pl.next_power_of_2(B))))
    n_blocks = pl.cdiv(B, block_b)
    bp = n_blocks * block_b

    # Wrapper-side layout plumbing (static, free): batch -> lanes, weights in
    # exactly the orientation the kernel consumes.
    xt = jnp.pad(x.T.astype(jnp.float32), ((0, 0), (0, bp - B)))
    w1f = w1.astype(jnp.float32)                 # (H, Din)
    b1c = b1.reshape(H, 1).astype(jnp.float32)   # (H, 1)
    w2t = w2.T.astype(jnp.float32)               # (H, O)
    b2c = b2.reshape(O, 1).astype(jnp.float32)   # (O, 1)

    flops = B * (2 * Din * H + H + 2 * H * O + 4 * O)
    bytes_accessed = 4 * (B * Din + H * Din + H + O * H + O + B * O)
    cost = pl.CostEstimate(flops=flops, transcendentals=B * O,
                           bytes_accessed=bytes_accessed)

    out_t = pl.pallas_call(
        _vnet_kernel,
        out_shape=jax.ShapeDtypeStruct((O, bp), jnp.float32),
        grid=(n_blocks,),
        in_specs=[
            pl.BlockSpec((Din, block_b), lambda i: (0, i)),  # x^T, blocked on batch
            pl.BlockSpec((H, Din), lambda i: (0, 0)),        # w1, VMEM-resident
            pl.BlockSpec((H, 1), lambda i: (0, 0)),          # b1
            pl.BlockSpec((H, O), lambda i: (0, 0)),          # w2^T
            pl.BlockSpec((O, 1), lambda i: (0, 0)),          # b2
        ],
        out_specs=pl.BlockSpec((O, block_b), lambda i: (0, i)),
        compiler_params=pltpu.CompilerParams(
            dimension_semantics=("parallel",),
            vmem_limit_bytes=64 * 1024 * 1024,
        ),
        cost_estimate=cost,
    )(xt, w1f, b1c, w2t, b2c)

    return out_t[:, :B].T  # back to (B, O), PyTorch convention


def init_vnet_params(key, in_features, hidden, out_features):
    """Deterministic init mirroring nn.Linear's default (uniform +/- 1/sqrt(fan_in))."""
    k1, k2, k3, k4 = jax.random.split(key, 4)
    bound1 = 1.0 / jnp.sqrt(in_features)
    bound2 = 1.0 / jnp.sqrt(hidden)
    w1 = jax.random.uniform(k1, (hidden, in_features), jnp.float32, -bound1, bound1)
    b1 = jax.random.uniform(k2, (hidden,), jnp.float32, -bound1, bound1)
    w2 = jax.random.uniform(k3, (out_features, hidden), jnp.float32, -bound2, bound2)
    b2 = jax.random.uniform(k4, (out_features,), jnp.float32, -bound2, bound2)
    return w1, b1, w2, b2


if __name__ == "__main__":
    # Small shapes consistent with VNet(input=4, hidden=32, output=1), batch=8.
    B, Din, H, O = 8, 4, 32, 1

    key = jax.random.PRNGKey(0)
    kx, kp = jax.random.split(key)
    x = jax.random.normal(kx, (B, Din), jnp.float32)
    w1, b1, w2, b2 = init_vnet_params(kp, Din, H, O)

    out = vnet_forward(x, w1, b1, w2, b2)
    out = jax.block_until_ready(out)

    # Reference in plain JAX (same math as the PyTorch forward).
    ref = jax.nn.sigmoid(jnp.maximum(x @ w1.T + b1, 0.0) @ w2.T + b2)
    assert out.shape == (B, O)
    # Tolerance widened slightly because the kernel uses the EUP approximate
    # reciprocal for the sigmoid divide.
    assert jnp.allclose(out, ref, atol=5e-3, rtol=5e-3), (out, ref)

    print("KERNEL_OK")
</pallas_src>

<mosaic_0001>
module attributes {stable_mosaic.version = 11 : i64} {
  func.func @_vnet_kernel(%arg0: i32, %arg1: memref<4x128xf32, #tpu.memory_space<vmem>>, %arg2: memref<32x4xf32, #tpu.memory_space<vmem>>, %arg3: memref<32x1xf32, #tpu.memory_space<vmem>>, %arg4: memref<32x1xf32, #tpu.memory_space<vmem>>, %arg5: memref<1x1xf32, #tpu.memory_space<vmem>>, %arg6: memref<1x128xf32, #tpu.memory_space<vmem>>) attributes {dimension_semantics = [#tpu.dimension_semantics<parallel>], iteration_bounds = array<i64: 1>, scalar_prefetch = 0 : i64, scratch_operands = 0 : i64, tpu.core_type = #tpu.core_type<tc>, window_params = [{transform_indices = @transform_0, window_bounds = array<i64: 4, 128>}, {pipeline_mode = #tpu.pipeline_mode<synchronous>, transform_indices = @transform_1, window_bounds = array<i64: 32, 4>}, {pipeline_mode = #tpu.pipeline_mode<synchronous>, transform_indices = @transform_2, window_bounds = array<i64: 32, 1>}, {pipeline_mode = #tpu.pipeline_mode<synchronous>, transform_indices = @transform_3, window_bounds = array<i64: 32, 1>}, {pipeline_mode = #tpu.pipeline_mode<synchronous>, transform_indices = @transform_4, window_bounds = array<i64: 1, 1>}, {transform_indices = @transform_5, window_bounds = array<i64: 1, 128>}]} {
    %c0 = arith.constant 0 : index
    %c0_0 = arith.constant 0 : index
    %0 = vector.load %arg1[%c0, %c0_0] : memref<4x128xf32, #tpu.memory_space<vmem>>, vector<4x128xf32>
    %c0_1 = arith.constant 0 : index
    %c0_2 = arith.constant 0 : index
    %1 = vector.load %arg3[%c0_1, %c0_2] : memref<32x1xf32, #tpu.memory_space<vmem>>, vector<32x1xf32>
    %c0_3 = arith.constant 0 : index
    %c0_4 = arith.constant 0 : index
    %2 = vector.load %arg2[%c0_3, %c0_4] : memref<32x4xf32, #tpu.memory_space<vmem>>, vector<32x1xf32>
    %3 = vector.extract_strided_slice %0 {offsets = [0, 0], sizes = [1, 128], strides = [1, 1]} : vector<4x128xf32> to vector<1x128xf32>
    %4 = vector.broadcast %2 : vector<32x1xf32> to vector<32x128xf32>
    %5 = vector.broadcast %3 : vector<1x128xf32> to vector<32x128xf32>
    %6 = arith.mulf %4, %5 : vector<32x128xf32>
    %7 = vector.broadcast %1 : vector<32x1xf32> to vector<32x128xf32>
    %8 = arith.addf %7, %6 : vector<32x128xf32>
    %c0_5 = arith.constant 0 : index
    %c1 = arith.constant 1 : index
    %9 = vector.load %arg2[%c0_5, %c1] : memref<32x4xf32, #tpu.memory_space<vmem>>, vector<32x1xf32>
    %10 = vector.extract_strided_slice %0 {offsets = [1, 0], sizes = [1, 128], strides = [1, 1]} : vector<4x128xf32> to vector<1x128xf32>
    %11 = vector.broadcast %9 : vector<32x1xf32> to vector<32x128xf32>
    %12 = vector.broadcast %10 : vector<1x128xf32> to vector<32x128xf32>
    %13 = arith.mulf %11, %12 : vector<32x128xf32>
    %14 = arith.addf %8, %13 : vector<32x128xf32>
    %c0_6 = arith.constant 0 : index
    %c2 = arith.constant 2 : index
    %15 = vector.load %arg2[%c0_6, %c2] : memref<32x4xf32, #tpu.memory_space<vmem>>, vector<32x1xf32>
    %16 = vector.extract_strided_slice %0 {offsets = [2, 0], sizes = [1, 128], strides = [1, 1]} : vector<4x128xf32> to vector<1x128xf32>
    %17 = vector.broadcast %15 : vector<32x1xf32> to vector<32x128xf32>
    %18 = vector.broadcast %16 : vector<1x128xf32> to vector<32x128xf32>
    %19 = arith.mulf %17, %18 : vector<32x128xf32>
    %20 = arith.addf %14, %19 : vector<32x128xf32>
    %c0_7 = arith.constant 0 : index
    %c3 = arith.constant 3 : index
    %21 = vector.load %arg2[%c0_7, %c3] : memref<32x4xf32, #tpu.memory_space<vmem>>, vector<32x1xf32>
    %22 = vector.extract_strided_slice %0 {offsets = [3, 0], sizes = [1, 128], strides = [1, 1]} : vector<4x128xf32> to vector<1x128xf32>
    %23 = vector.broadcast %21 : vector<32x1xf32> to vector<32x128xf32>
    %24 = vector.broadcast %22 : vector<1x128xf32> to vector<32x128xf32>
    %25 = arith.mulf %23, %24 : vector<32x128xf32>
    %26 = arith.addf %20, %25 : vector<32x128xf32>
    %cst = arith.constant 0.000000e+00 : f32
    %27 = vector.broadcast %cst : f32 to vector<32x128xf32>
    %28 = arith.maximumf %26, %27 : vector<32x128xf32>
    %c0_8 = arith.constant 0 : index
    %c0_9 = arith.constant 0 : index
    %29 = vector.load %arg4[%c0_8, %c0_9] : memref<32x1xf32, #tpu.memory_space<vmem>>, vector<32x1xf32>
    %30 = vector.broadcast %29 : vector<32x1xf32> to vector<32x128xf32>
    %31 = arith.mulf %28, %30 : vector<32x128xf32>
    %cst_10 = arith.constant dense<0.000000e+00> : vector<128xf32>
    %32 = vector.multi_reduction <add>, %31, %cst_10 [0] : vector<32x128xf32> to vector<128xf32>
    %33 = vector.shape_cast %32 : vector<128xf32> to vector<1x128xf32>
    %c0_11 = arith.constant 0 : index
    %c0_12 = arith.constant 0 : index
    %34 = vector.load %arg5[%c0_11, %c0_12] : memref<1x1xf32, #tpu.memory_space<vmem>>, vector<1x1xf32>
    %35 = vector.broadcast %34 : vector<1x1xf32> to vector<1x128xf32>
    %36 = arith.addf %33, %35 : vector<1x128xf32>
    %cst_13 = arith.constant 0.000000e+00 : f32
    %37 = vector.broadcast %cst_13 : f32 to vector<1x128xf32>
    %38 = arith.subf %37, %36 : vector<1x128xf32>
    %39 = math.exp %38 : vector<1x128xf32>
    %cst_14 = arith.constant 1.000000e+00 : f32
    %40 = vector.broadcast %cst_14 : f32 to vector<1x128xf32>
    %41 = arith.addf %40, %39 : vector<1x128xf32>
    %42 = tpu.reciprocal %41 {approx = true} : vector<1x128xf32> -> vector<1x128xf32>
    %c0_15 = arith.constant 0 : index
    %c0_16 = arith.constant 0 : index
    %43 = vector.load %arg6[%c0_15, %c0_16] : memref<1x128xf32, #tpu.memory_space<vmem>>, vector<1x128xf32>
    tpu.vector_store %arg6[%c0_15, %c0_16], %42 {strides = array<i32>} : memref<1x128xf32, #tpu.memory_space<vmem>>, vector<1x128xf32>,
    return
  }
  func.func @transform_0(%arg0: i32) -> (i32, i32) {
    %c0_i32 = arith.constant 0 : i32
    %c0_i32_0 = arith.constant 0 : i32
    return %c0_i32, %arg0 : i32, i32
  }
  func.func @transform_1(%arg0: i32) -> (i32, i32) {
    %c0_i32 = arith.constant 0 : i32
    %c0_i32_0 = arith.constant 0 : i32
    %c0_i32_1 = arith.constant 0 : i32
    return %c0_i32, %c0_i32_0 : i32, i32
  }
  func.func @transform_2(%arg0: i32) -> (i32, i32) {
    %c0_i32 = arith.constant 0 : i32
    %c0_i32_0 = arith.constant 0 : i32
    %c0_i32_1 = arith.constant 0 : i32
    return %c0_i32, %c0_i32_0 : i32, i32
  }
  func.func @transform_3(%arg0: i32) -> (i32, i32) {
    %c0_i32 = arith.constant 0 : i32
    %c0_i32_0 = arith.constant 0 : i32
    %c0_i32_1 = arith.constant 0 : i32
    return %c0_i32, %c0_i32_0 : i32, i32
  }
  func.func @transform_4(%arg0: i32) -> (i32, i32) {
    %c0_i32 = arith.constant 0 : i32
    %c0_i32_0 = arith.constant 0 : i32
    %c0_i32_1 = arith.constant 0 : i32
    return %c0_i32, %c0_i32_0 : i32, i32
  }
  func.func @transform_5(%arg0: i32) -> (i32, i32) {
    %c0_i32 = arith.constant 0 : i32
    %c0_i32_0 = arith.constant 0 : i32
    return %c0_i32, %arg0 : i32, i32
  }
}

</mosaic_0001>

<llo_original>
// kernel: tpu_custom_call.1
$region0: #{tpu_custom_call.1}
  #allocation0 [shape = 'u32[]', space=smem, size = 0x4, offset = 0x4, fixed_abs, tag = 'smem constant byte address 0x4 - core index']
  #allocation1 [shape = 'u32[144,128]{1,0:T(1,128)}', space=vmem, size = 0x12000, scoped, tag = 'internal scratch']
  #allocation2 [shape = 'f32[1,1]{1,0:T(1,128)S(1)}', space=vmem, size = 0x200, scoped, tag = 'scoped memory for tpu_custom_call.1']
  %s0 = inlined_call_operand.vmem [shape: f32[4,128], index: 0, kind: input, shape index: {}]
  %s1 = inlined_call_operand.vmem [shape: f32[32,4], index: 1, kind: input, shape index: {}]
  %s2 = inlined_call_operand.vmem [shape: f32[32,1], index: 2, kind: input, shape index: {}]
  %s3 = inlined_call_operand.vmem [shape: f32[32,1], index: 3, kind: input, shape index: {}]
  %s4 = inlined_call_operand.<no memory space> [shape: f32[1,1], index: 4, kind: input, shape index: {}]
  %s5 = inlined_call_operand.hbm [shape: f32[1,128], index: 5, kind: output, shape index: {}]
  %s6 = sld [smem:[#allocation0]]
  $region30: #{tpu_custom_call.1} parent=0
    _
  %s8 = ssub.s32 1, %s6
  %s9 = scalar_select 0, %s8, %s6
  %v10 = vstv %s4
  %11 = vst [vmem:[#allocation2] sm:$0x1] %v10
  $region1: #{tpu_custom_call.1} parent=0
    #allocation3 [shape = 'u8[512]{0}', space=vmem, size = 0x400, scoped, tag = 'output window, operand 0, single buffered']
    #allocation4 [shape = 's32[1]{0}', space=sflag, size = 0x4, scoped, tag = 'scoped memory for tpu_custom_call.1']
    %12 = vsyncpa [#allocation4], 0
    // Predicated region
    $region2: #{tpu_custom_call.1} parent=1 // pred_check
      _
    $region3: #{tpu_custom_call.1} parent=1 // pred_check_branch
      %14 = sbr.rel (0) target = $region5
    $region4: #{tpu_custom_call.1} parent=1 // pred_region
      _
    $region5: #{tpu_custom_call.1} parent=1 // pred_fallthru
      _
    // Predicated region
    $region6: #{tpu_custom_call.1} parent=1 // pred_check
      _
    $region7: #{tpu_custom_call.1} parent=1 // pred_check_branch
      %16 = sbr.rel (0) target = $region9
    $region8: #{tpu_custom_call.1} parent=1 // pred_region
      _
    $region9: #{tpu_custom_call.1} parent=1 // pred_fallthru
      _
    // Predicated region
    $region10: #{tpu_custom_call.1} parent=1 // pred_check
      _
    $region11: #{tpu_custom_call.1} parent=1 // pred_check_branch
      %18 = sbr.rel (0) target = $region13
    $region12: #{tpu_custom_call.1} parent=1 // pred_region
      _
    $region13: #{tpu_custom_call.1} parent=1 // pred_fallthru
      _
    // Predicated region
    $region14: #{tpu_custom_call.1} parent=1 // pred_check
      _
    $region15: #{tpu_custom_call.1} parent=1 // pred_check_branch
      %20 = sbr.rel (0) target = $region17
    $region16: #{tpu_custom_call.1} parent=1 // pred_region
      _
    $region17: #{tpu_custom_call.1} parent=1 // pred_fallthru
      _
    // Predicated region
    $region18: #{tpu_custom_call.1} parent=1 // pred_check
      _
    $region19: #{tpu_custom_call.1} parent=1 // pred_check_branch
      %22 = sbr.rel (0) target = $region21
    $region20: #{tpu_custom_call.1} parent=1 // pred_region
      _
    $region21: #{tpu_custom_call.1} parent=1 // pred_fallthru
      _
    %v23 = vld [vmem:[%s0] sm:$0xf]
    %v24 = vld [vmem:[%s2] sm:$0xff]
    %v25 = vld [vmem:[%s2 + $0x8] sm:$0xff]
    %v26 = vld [vmem:[%s2 + $0x10] sm:$0xff]
    %v27 = vld [vmem:[%s2 + $0x18] sm:$0xff]
    %v28 = vld [vmem:[%s1] sm:$0xff]
    %v29 = vld [vmem:[%s1 + $0x8] sm:$0xff]
    %v30 = vld [vmem:[%s1 + $0x10] sm:$0xff]
    %v31 = vld [vmem:[%s1 + $0x18] sm:$0xff]
    %33 = vset.pattern.permute.xlu0 0
    %34 = vperm.xlu0 %33, %v28
    %v35 = vpop.permute.xlu0 %34
    %38 = vset.pattern.permute.xlu0 0
    %39 = vperm.xlu0 %38, %v29
    %v40 = vpop.permute.xlu0 %39
    %43 = vset.pattern.permute.xlu0 0
    %44 = vperm.xlu0 %43, %v30
    %v45 = vpop.permute.xlu0 %44
    %48 = vset.pattern.permute.xlu0 0
    %49 = vperm.xlu0 %48, %v31
    %v50 = vpop.permute.xlu0 %49
    %v52 = vlaneseq
    %v53 = vshrl.u32 %v52, 7
    %v54 = vsub.s32 0, %v53
    %v55 = vrot.slane %v23, %v54
    %v56 = vmul.f32 %v35, %v55
    %v57 = vmul.f32 %v40, %v55
    %v58 = vmul.f32 %v45, %v55
    %v59 = vmul.f32 %v50, %v55
    %61 = vset.pattern.permute.xlu0 0
    %62 = vperm.xlu0 %61, %v24
    %v63 = vpop.permute.xlu0 %62
    %66 = vset.pattern.permute.xlu0 0
    %67 = vperm.xlu0 %66, %v25
    %v68 = vpop.permute.xlu0 %67
    %71 = vset.pattern.permute.xlu0 0
    %72 = vperm.xlu0 %71, %v26
    %v73 = vpop.permute.xlu0 %72
    %76 = vset.pattern.permute.xlu0 0
    %77 = vperm.xlu0 %76, %v27
    %v78 = vpop.permute.xlu0 %77
    %v80 = vadd.f32 %v63, %v56
    %v81 = vadd.f32 %v68, %v57
    %v82 = vadd.f32 %v73, %v58
    %v83 = vadd.f32 %v78, %v59
    %84 = vset.pattern.permute.xlu0 1
    %85 = vperm.xlu0 %84, %v28
    %v86 = vpop.permute.xlu0 %85
    %88 = vset.pattern.permute.xlu0 1
    %89 = vperm.xlu0 %88, %v29
    %v90 = vpop.permute.xlu0 %89
    %92 = vset.pattern.permute.xlu0 1
    %93 = vperm.xlu0 %92, %v30
    %v94 = vpop.permute.xlu0 %93
    %96 = vset.pattern.permute.xlu0 1
    %97 = vperm.xlu0 %96, %v31
    %v98 = vpop.permute.xlu0 %97
    %v100 = vlaneseq
    %v101 = vshrl.u32 %v100, 7
    %v102 = vsub.s32 1, %v101
    %v103 = vrot.slane %v23, %v102
    %v104 = vmul.f32 %v86, %v103
    %v105 = vmul.f32 %v90, %v103
    %v106 = vmul.f32 %v94, %v103
    %v107 = vmul.f32 %v98, %v103
    %v108 = vadd.f32 %v80, %v104
    %v109 = vadd.f32 %v81, %v105
    %v110 = vadd.f32 %v82, %v106
    %v111 = vadd.f32 %v83, %v107
    %112 = vset.pattern.permute.xlu0 2
    %113 = vperm.xlu0 %112, %v28
    %v114 = vpop.permute.xlu0 %113
    %116 = vset.pattern.permute.xlu0 2
    %117 = vperm.xlu0 %116, %v29
    %v118 = vpop.permute.xlu0 %117
    %120 = vset.pattern.permute.xlu0 2
    %121 = vperm.xlu0 %120, %v30
    %v122 = vpop.permute.xlu0 %121
    %124 = vset.pattern.permute.xlu0 2
    %125 = vperm.xlu0 %124, %v31
    %v126 = vpop.permute.xlu0 %125
    %v128 = vlaneseq
    %v129 = vshrl.u32 %v128, 7
    %v130 = vsub.s32 2, %v129
    %v131 = vrot.slane %v23, %v130
    %v132 = vmul.f32 %v114, %v131
    %v133 = vmul.f32 %v118, %v131
    %v134 = vmul.f32 %v122, %v131
    %v135 = vmul.f32 %v126, %v131
    %v136 = vadd.f32 %v108, %v132
    %v137 = vadd.f32 %v109, %v133
    %v138 = vadd.f32 %v110, %v134
    %v139 = vadd.f32 %v111, %v135
    %140 = vset.pattern.permute.xlu0 3
    %141 = vperm.xlu0 %140, %v28
    %v142 = vpop.permute.xlu0 %141
    %144 = vset.pattern.permute.xlu0 3
    %145 = vperm.xlu0 %144, %v29
    %v146 = vpop.permute.xlu0 %145
    %148 = vset.pattern.permute.xlu0 3
    %149 = vperm.xlu0 %148, %v30
    %v150 = vpop.permute.xlu0 %149
    %152 = vset.pattern.permute.xlu0 3
    %153 = vperm.xlu0 %152, %v31
    %v154 = vpop.permute.xlu0 %153
    %v156 = vlaneseq
    %v157 = vshrl.u32 %v156, 7
    %v158 = vsub.s32 3, %v157
    %v159 = vrot.slane %v23, %v158
    %v160 = vmul.f32 %v142, %v159
    %v161 = vmul.f32 %v146, %v159
    %v162 = vmul.f32 %v150, %v159
    %v163 = vmul.f32 %v154, %v159
    %v164 = vadd.f32 %v136, %v160
    %v165 = vadd.f32 %v137, %v161
    %v166 = vadd.f32 %v138, %v162
    %v167 = vadd.f32 %v139, %v163
    %v168 = vmax.f32 %v164, 0.0
    %v169 = vmax.f32 %v165, 0.0
    %v170 = vmax.f32 %v166, 0.0
    %v171 = vmax.f32 %v167, 0.0
    %v172 = vld [vmem:[%s3] sm:$0xff]
    %v173 = vld [vmem:[%s3 + $0x8] sm:$0xff]
    %v174 = vld [vmem:[%s3 + $0x10] sm:$0xff]
    %v175 = vld [vmem:[%s3 + $0x18] sm:$0xff]
    %177 = vset.pattern.permute.xlu0 0
    %178 = vperm.xlu0 %177, %v172
    %v179 = vpop.permute.xlu0 %178
    %182 = vset.pattern.permute.xlu0 0
    %183 = vperm.xlu0 %182, %v173
    %v184 = vpop.permute.xlu0 %183
    %187 = vset.pattern.permute.xlu0 0
    %188 = vperm.xlu0 %187, %v174
    %v189 = vpop.permute.xlu0 %188
    %192 = vset.pattern.permute.xlu0 0
    %193 = vperm.xlu0 %192, %v175
    %v194 = vpop.permute.xlu0 %193
    %v196 = vmul.f32 %v168, %v179
    %v197 = vmul.f32 %v169, %v184
    %v198 = vmul.f32 %v170, %v189
    %v199 = vmul.f32 %v171, %v194
    %v200 = vadd.f32 %v196, %v197
    %v201 = vadd.f32 %v200, %v198
    %v202 = vadd.f32 %v201, %v199
    %v203 = vrot.slane %v202, 4
    %v204 = vadd.f32 %v202, %v203
    %v205 = vrot.slane %v204, 2
    %v206 = vadd.f32 %v204, %v205
    %v207 = vrot.slane %v206, 1
    %v208 = vadd.f32 %v206, %v207
    %v209 = vld [vmem:[#allocation2] sm:$0x1]
    %211 = vset.pattern.permute.xlu0 0
    %212 = vperm.xlu0 %211, %v209
    %v213 = vpop.permute.xlu0 %212
    %v215 = vlaneseq
    %v216 = vshrl.u32 %v215, 7
    %v217 = vsub.s32 0, %v216
    %v218 = vrot.slane %v213, %v217
    %v219 = vadd.f32 %v208, %v218
    %v220 = vsub.f32 0.0, %v219
    %v221 = vmul.f32 %v220, 1.442695
    %v222 = vpow.pop %v221
    %v223 = vadd.f32 %v222, 1.0
    %v224 = vrcp.pop %v223
    %225 = vst [vmem:[#allocation3] sm:$0x1] %v224
    // Predicated region
    $region22: #{tpu_custom_call.1} parent=1 // pred_check
      _
    $region23: #{tpu_custom_call.1} parent=1 // pred_check_branch
      %227 = sbr.rel (0) target = $region25
    $region24: #{tpu_custom_call.1} parent=1 // pred_region
      %s229 = ssub.s32 16, 16
      %230 = vsyncadd [#allocation4], %s229
      %s232 = sshll.u32 [#allocation3], 4
      %s233 = int_to_ptr.vmem [resolvable:$true] %s232
      %235 = dma.vmem_to_hbm [thread:$0]  %s233, 16, %s5, [#allocation4]
    $region25: #{tpu_custom_call.1} parent=1 // pred_fallthru
      _
    // Predicated region
    $region26: #{tpu_custom_call.1} parent=1 // pred_check
      _
    $region27: #{tpu_custom_call.1} parent=1 // pred_check_branch
      %237 = sbr.rel (0) target = $region29
    $region28: #{tpu_custom_call.1} parent=1 // pred_region
      %238 = dma.done [#allocation4], 16
    $region29: #{tpu_custom_call.1} parent=1 // pred_fallthru
      _
    %239 = vsyncpa [#allocation4], 1

</llo_original>
